<compile_context>
chip_gen: v7x
topology: tpu7x:2x2x1
jax: 0.10.0
libtpu: 0.0.40
codegen_flags: <defaults>
</compile_context>

<pallas_src>
import math

import jax
import jax.numpy as jnp
from jax.experimental import pallas as pl
from jax.experimental.pallas import tpu as pltpu


def simple_net_kernel(xT_ref, w1T_ref, b1_ref, w2_ref, b2_ref, o_ref):
    # Layer 1 on the MXU, feature-major: (H, 14) @ (14, block_b) -> (H, block_b) f32.
    h = jnp.dot(w1T_ref[...], xT_ref[...], preferred_element_type=jnp.float32)
    # Bias (H, 1) broadcast along lanes + ReLU on the VPU in f32.
    h = jnp.maximum(h + b1_ref[...], 0.0)
    # Layer 2 as a second MXU matmul: (1, H) @ (H, block_b) -> (1, block_b).
    # Result is already lane-dense; no sublane->lane relayout needed.
    y = jnp.dot(w2_ref[...], h, preferred_element_type=jnp.float32)
    o_ref[...] = (y + b2_ref[0, 0]).astype(o_ref.dtype)   # scalar bias from SMEM


def _round_up(n, m):
    return (n + m - 1) // m * m


def _choose_block_b(B, requested):
    """128-multiple tile; >=2 grid steps when possible (v7x dual TC); minimal tail pad."""
    requested = max(128, _round_up(requested, 128))
    Bp128 = _round_up(B, 128)
    if Bp128 <= 128:
        return 128                                   # tiny batch: one small step
    n_steps = max(2, pl.cdiv(B, requested))          # at least 2 steps for v7x
    return _round_up(pl.cdiv(B, n_steps), 128)       # minimizes round_up(B, blk) - B


def simple_net(x, w1, b1, w2, b2, *, block_b=16384, use_bf16=True,
               x_is_feature_major=False, column_output=True):
    """Forward pass of SimpleNet.

    x: (B, 14) f32, or (14, B) if x_is_feature_major=True (preferred: avoids a
       wrapper-side relayout pass; ideally the producer already emits bf16).
    Returns (B, 1) f32 (PyTorch semantics) or (B,) if column_output=False
    (avoids a lane->sublane relayout in XLA for consumers that accept it).
    """
    if x_is_feature_major:
        D_in, B = x.shape
        xT = x
    else:
        B, D_in = x.shape
        xT = x.T                                      # (14, B) feature-major
    H = w1.shape[1]

    in_dtype = jnp.bfloat16 if use_bf16 else jnp.float32
    # Transpose + cast in one expression so XLA fuses it into a single pass.
    xT = xT.astype(in_dtype)

    block_b = _choose_block_b(B, block_b)
    Bp = _round_up(B, block_b)
    if Bp != B:
        xT = jnp.pad(xT, ((0, 0), (0, Bp - B)))       # zero-pad ragged tail (lanes)

    w1T = w1.T.astype(in_dtype)                       # (H, 14) MXU lhs, resident
    b1_col = b1.reshape(H, 1).astype(jnp.float32)     # (H, 1) broadcast over lanes
    w2_row = w2.reshape(1, H).astype(jnp.float32)     # (1, H) second-layer MXU lhs
    b2k = b2.reshape(1, 1).astype(jnp.float32)        # scalar -> SMEM

    grid = (Bp // block_b,)
    out2d = pl.pallas_call(
        simple_net_kernel,
        out_shape=jax.ShapeDtypeStruct((1, Bp), jnp.float32),
        grid_spec=pltpu.PrefetchScalarGridSpec(
            num_scalar_prefetch=0,
            grid=grid,
            in_specs=[
                pl.BlockSpec((D_in, block_b), lambda i: (0, i)),    # x^T tile (streamed)
                pl.BlockSpec((H, D_in), lambda i: (0, 0)),          # w1^T (resident)
                pl.BlockSpec((H, 1), lambda i: (0, 0)),             # b1 column
                pl.BlockSpec((1, H), lambda i: (0, 0)),             # w2 row
                pl.BlockSpec(memory_space=pltpu.MemorySpace.SMEM),  # b2 scalar
            ],
            out_specs=pl.BlockSpec((1, block_b), lambda i: (0, i)),  # lane-dense
        ),
        compiler_params=pltpu.CompilerParams(
            dimension_semantics=("parallel",),   # shards batch steps across v7x TCs
        ),
    )(xT, w1T, b1_col, w2_row, b2k)

    flat = out2d.reshape(Bp)[:B]                      # valid rows only
    if column_output:
        return flat[:, None]                          # (B, 1) to match PyTorch
    return flat                                       # (B,) — no relayout


def init_params(key, hidden_size, in_features=14, out_features=1):
    # Deterministic init matching nn.Linear default: U(-1/sqrt(fan_in), 1/sqrt(fan_in)).
    k1, k2, k3, k4 = jax.random.split(key, 4)
    bound1 = 1.0 / math.sqrt(in_features)
    bound2 = 1.0 / math.sqrt(hidden_size)
    w1 = jax.random.uniform(k1, (in_features, hidden_size), jnp.float32, -bound1, bound1)
    b1 = jax.random.uniform(k2, (1, hidden_size), jnp.float32, -bound1, bound1)
    w2 = jax.random.uniform(k3, (hidden_size, out_features), jnp.float32, -bound2, bound2)
    b2 = jax.random.uniform(k4, (1, out_features), jnp.float32, -bound2, bound2)
    return w1, b1, w2, b2


def simple_net_ref(x, w1, b1, w2, b2, *, use_bf16=True):
    # Pure-JAX reference; optionally mirrors the kernel's bf16 MXU-operand cast.
    if use_bf16:
        x = x.astype(jnp.bfloat16)
        w1 = w1.astype(jnp.bfloat16)
    h = jnp.maximum(jnp.dot(x, w1, preferred_element_type=jnp.float32) + b1, 0.0)
    return jnp.dot(h, w2, preferred_element_type=jnp.float32) + b2


if __name__ == "__main__":
    hidden_size = 32
    batch = 200        # not a multiple of 128: exercises padding + 2 grid steps
    block_b = 128      # small tile for the demo; default is 16384 for real batches

    key = jax.random.PRNGKey(0)
    kx, kp = jax.random.split(key)
    x = jax.random.normal(kx, (batch, 14), jnp.float32)
    w1, b1, w2, b2 = init_params(kp, hidden_size)

    # f32 path: matches the original PyTorch semantics tightly.
    out_f32 = jax.block_until_ready(
        simple_net(x, w1, b1, w2, b2, block_b=block_b, use_bf16=False))
    ref_f32 = simple_net_ref(x, w1, b1, w2, b2, use_bf16=False)
    assert out_f32.shape == (batch, 1), out_f32.shape
    assert jnp.allclose(out_f32, ref_f32, atol=1e-5, rtol=1e-5), "f32 mismatch vs reference"

    # Default bf16-MXU-operand path: compare against a reference with the same cast.
    out_bf16 = jax.block_until_ready(
        simple_net(x, w1, b1, w2, b2, block_b=block_b))
    ref_bf16 = simple_net_ref(x, w1, b1, w2, b2, use_bf16=True)
    assert out_bf16.shape == (batch, 1), out_bf16.shape
    assert jnp.allclose(out_bf16, ref_bf16, atol=1e-4, rtol=1e-4), "bf16 mismatch vs reference"

    # Feature-major fast path (caller supplies x^T, skips wrapper relayout) and
    # row-vector output (skips the (1,B)->(B,1) relayout).
    out_fm = jax.block_until_ready(
        simple_net(x.T, w1, b1, w2, b2, block_b=block_b,
                   x_is_feature_major=True, column_output=False))
    assert out_fm.shape == (batch,), out_fm.shape
    assert jnp.allclose(out_fm, ref_bf16[:, 0], atol=1e-4, rtol=1e-4), "feature-major mismatch"

    print("KERNEL_OK")
</pallas_src>

<mosaic_0001>
module attributes {stable_mosaic.version = 11 : i64} {
  func.func @simple_net_kernel(%arg0: i32, %arg1: memref<14x128xf32, #tpu.memory_space<vmem>>, %arg2: memref<32x14xf32, #tpu.memory_space<vmem>>, %arg3: memref<32x1xf32, #tpu.memory_space<vmem>>, %arg4: memref<1x32xf32, #tpu.memory_space<vmem>>, %arg5: memref<1x1xf32, #tpu.memory_space<smem>>, %arg6: memref<1x128xf32, #tpu.memory_space<vmem>>) attributes {dimension_semantics = [#tpu.dimension_semantics<parallel>], iteration_bounds = array<i64: 2>, scalar_prefetch = 0 : i64, scratch_operands = 0 : i64, tpu.core_type = #tpu.core_type<tc>, window_params = [{transform_indices = @transform_0, window_bounds = array<i64: 14, 128>}, {pipeline_mode = #tpu.pipeline_mode<synchronous>, transform_indices = @transform_1, window_bounds = array<i64: 32, 14>}, {pipeline_mode = #tpu.pipeline_mode<synchronous>, transform_indices = @transform_2, window_bounds = array<i64: 32, 1>}, {pipeline_mode = #tpu.pipeline_mode<synchronous>, transform_indices = @transform_3, window_bounds = array<i64: 1, 32>}, {transform_indices = @transform_4, window_bounds = array<i64: 1, 1>}, {transform_indices = @transform_5, window_bounds = array<i64: 1, 128>}]} {
    %c0 = arith.constant 0 : index
    %c0_0 = arith.constant 0 : index
    %0 = vector.load %arg2[%c0, %c0_0] : memref<32x14xf32, #tpu.memory_space<vmem>>, vector<32x14xf32>
    %c0_1 = arith.constant 0 : index
    %c0_2 = arith.constant 0 : index
    %1 = vector.load %arg1[%c0_1, %c0_2] : memref<14x128xf32, #tpu.memory_space<vmem>>, vector<14x128xf32>
    %cst = arith.constant dense<0.000000e+00> : vector<32x128xf32>
    %2 = tpu.matmul %0, %1, %cst {dimension_numbers = #tpu.dot_dimension_numbers<[1], [0], [0], [1], [0, 0, 1, 1], [], []>} : vector<32x14xf32>, vector<14x128xf32>, vector<32x128xf32> -> vector<32x128xf32>
    %c0_3 = arith.constant 0 : index
    %c0_4 = arith.constant 0 : index
    %3 = vector.load %arg3[%c0_3, %c0_4] : memref<32x1xf32, #tpu.memory_space<vmem>>, vector<32x1xf32>
    %4 = vector.broadcast %3 : vector<32x1xf32> to vector<32x128xf32>
    %5 = arith.addf %2, %4 : vector<32x128xf32>
    %cst_5 = arith.constant 0.000000e+00 : f32
    %6 = vector.broadcast %cst_5 : f32 to vector<32x128xf32>
    %7 = arith.maximumf %5, %6 : vector<32x128xf32>
    %c0_6 = arith.constant 0 : index
    %c0_7 = arith.constant 0 : index
    %8 = vector.load %arg4[%c0_6, %c0_7] : memref<1x32xf32, #tpu.memory_space<vmem>>, vector<1x32xf32>
    %cst_8 = arith.constant dense<0.000000e+00> : vector<1x128xf32>
    %9 = tpu.matmul %8, %7, %cst_8 {dimension_numbers = #tpu.dot_dimension_numbers<[1], [0], [0], [1], [0, 0, 1, 1], [], []>} : vector<1x32xf32>, vector<32x128xf32>, vector<1x128xf32> -> vector<1x128xf32>
    %c0_9 = arith.constant 0 : index
    %c0_10 = arith.constant 0 : index
    %10 = memref.load %arg5[%c0_9, %c0_10] : memref<1x1xf32, #tpu.memory_space<smem>>
    %11 = vector.broadcast %10 : f32 to vector<1x128xf32>
    %12 = arith.addf %9, %11 : vector<1x128xf32>
    %c0_11 = arith.constant 0 : index
    %c0_12 = arith.constant 0 : index
    %13 = vector.load %arg6[%c0_11, %c0_12] : memref<1x128xf32, #tpu.memory_space<vmem>>, vector<1x128xf32>
    tpu.vector_store %arg6[%c0_11, %c0_12], %12 {strides = array<i32>} : memref<1x128xf32, #tpu.memory_space<vmem>>, vector<1x128xf32>,
    return
  }
  func.func @transform_0(%arg0: i32) -> (i32, i32) {
    %c0_i32 = arith.constant 0 : i32
    %c0_i32_0 = arith.constant 0 : i32
    return %c0_i32, %arg0 : i32, i32
  }
  func.func @transform_1(%arg0: i32) -> (i32, i32) {
    %c0_i32 = arith.constant 0 : i32
    %c0_i32_0 = arith.constant 0 : i32
    %c0_i32_1 = arith.constant 0 : i32
    return %c0_i32, %c0_i32_0 : i32, i32
  }
  func.func @transform_2(%arg0: i32) -> (i32, i32) {
    %c0_i32 = arith.constant 0 : i32
    %c0_i32_0 = arith.constant 0 : i32
    %c0_i32_1 = arith.constant 0 : i32
    return %c0_i32, %c0_i32_0 : i32, i32
  }
  func.func @transform_3(%arg0: i32) -> (i32, i32) {
    %c0_i32 = arith.constant 0 : i32
    %c0_i32_0 = arith.constant 0 : i32
    %c0_i32_1 = arith.constant 0 : i32
    return %c0_i32, %c0_i32_0 : i32, i32
  }
  func.func @transform_4(%arg0: i32) -> (i32, i32) {
    %c0_i32 = arith.constant 0 : i32
    %c0_i32_0 = arith.constant 0 : i32
    %c0_i32_1 = arith.constant 0 : i32
    return %c0_i32, %c0_i32_0 : i32, i32
  }
  func.func @transform_5(%arg0: i32) -> (i32, i32) {
    %c0_i32 = arith.constant 0 : i32
    %c0_i32_0 = arith.constant 0 : i32
    return %c0_i32, %arg0 : i32, i32
  }
}

</mosaic_0001>

<llo_original>
// kernel: tpu_custom_call.1
$region0: #{tpu_custom_call.1}
  #allocation0 [shape = 'u32[]', space=smem, size = 0x4, offset = 0x4, fixed_abs, tag = 'smem constant byte address 0x4 - core index']
  #allocation1 [shape = 'u32[144,128]{1,0:T(1,128)}', space=vmem, size = 0x12000, scoped, tag = 'internal scratch']
  #allocation2 [shape = 'f32[1,1]{1,0:T(1,128)S(6)}', space=smem, size = 0x200, scoped, tag = 'scoped memory for tpu_custom_call.1']
  %s0 = inlined_call_operand.vmem [shape: f32[14,256], index: 0, kind: input, shape index: {}]
  %s1 = inlined_call_operand.vmem [shape: f32[32,14], index: 1, kind: input, shape index: {}]
  %s2 = inlined_call_operand.vmem [shape: f32[32,1], index: 2, kind: input, shape index: {}]
  %s3 = inlined_call_operand.vmem [shape: f32[1,32], index: 3, kind: input, shape index: {}]
  %s4 = inlined_call_operand.<no memory space> [shape: f32[1,1], index: 4, kind: input, shape index: {}]
  %s5 = inlined_call_operand.hbm [shape: f32[1,256], index: 5, kind: output, shape index: {}]
  %s6 = sld [smem:[#allocation0]]
  $region91: #{tpu_custom_call.1} parent=0
    _
  %s8 = ssub.s32 1, %s6
  %s9 = scalar_select 0, %s8, %s6
  %10 = sst [smem:[#allocation2]] %s4
  $region1: #{tpu_custom_call.1} parent=0
    #allocation3 [shape = 'u8[16384]{0}', space=vmem, size = 0x4000, scoped, tag = 'input window, operand 0']
    #allocation4 [shape = 'u8[1024]{0}', space=vmem, size = 0x400, scoped, tag = 'output window, operand 0']
    #allocation5 [shape = 's32[2]{0}', space=sflag, size = 0x8, scoped, tag = 'scoped memory for tpu_custom_call.1']
    %11 = vsyncpa [#allocation5], 0
    %s12 = scalar_lea.sflag [#allocation5], 1
    %13 = vsyncpa %s12, 0
    loop: start=0, step=1, limit=4
    $region2: #{tpu_custom_call.1} parent=1 // loop_pre_header
      _
    $region3: #{tpu_custom_call.1} parent=1 // loop_header
      %s15 = sphi 0, %s19
      %p16 = scmp.ge.s32.totalorder %s15, 4
      %s25 = sphi 0, %s27
      %s28 = sphi 0, %s25
      %s29 = sphi 0, %s28
      %s45 = sphi 0, %s29
      %s49 = sphi 0, %s49
      %s51 = sphi 0, %s49
      %s52 = sphi 0, %s51
      %s66 = sphi 0, %s52
      %s70 = sphi 0, %s70
      %s72 = sphi 0, %s70
      %s73 = sphi 0, %s72
      %s87 = sphi 0, %s73
      %s91 = sphi 0, %s91
      %s93 = sphi 0, %s91
      %s94 = sphi 0, %s93
      %s108 = sphi 0, %s94
      %s112 = sphi 0, %s112
      %s114 = sphi 0, %s112
      %s115 = sphi 0, %s114
      %s129 = sphi 0, %s115
      %s135 = sphi 0, %s137
      %s138 = sphi 0, %s135
      %s139 = sphi 0, %s138
      %s155 = sphi 0, %s139
    $region4: #{tpu_custom_call.1} parent=1 // loop_header_branch
      %18 = sbr.rel (%p16) target = $region8
    $region5: #{tpu_custom_call.1} parent=1 // loop_body
      %s20 = ssub.s32 %s15, 1
      %s21 = ssub.s32 %s15, 2
      %s22 = sadd.s32 %s15, 1
      %s23 = ssub.s32 %s15, %s22
      %p24 = scmp.eq.s32.totalorder %s23, 0
      %s26 = sadd.s32 %s25, 1
      %s27 = scalar_select %p24, %s25, %s26
      %p30 = pneg %p24
      %p31 = scmp.eq.s32.totalorder %s15, 1
      %p32 = por %p30, %p31
      %p33 = scmp.ne.s32.totalorder %s25, %s28
      %p34 = scmp.eq.s32.totalorder %s15, 0
      %p35 = por %p33, %p34
      %p36 = scmp.ne.s32.totalorder %s25, %s28
      %p37 = scmp.eq.s32.totalorder %s20, 1
      %p38 = por %p36, %p37
      %p39 = scmp.ne.s32.totalorder %s28, %s29
      %p40 = scmp.eq.s32.totalorder %s20, 0
      %p41 = por %p39, %p40
      %p42 = scmp.ne.s32.totalorder %s28, %s29
      %p43 = scmp.eq.s32.totalorder %s21, 1
      %p44 = por %p42, %p43
      %p46 = scmp.ne.s32.totalorder %s29, %s45
      %p47 = scmp.eq.s32.totalorder %s21, 0
      %p48 = por %p46, %p47
      %s50 = sadd.s32 %s49, 1
      %p53 = scmp.eq.s32.totalorder %s15, 1
      %p54 = scmp.ne.s32.totalorder %s49, %s51
      %p55 = scmp.eq.s32.totalorder %s15, 0
      %p56 = por %p54, %p55
      %p57 = scmp.ne.s32.totalorder %s49, %s51
      %p58 = scmp.eq.s32.totalorder %s20, 1
      %p59 = por %p57, %p58
      %p60 = scmp.ne.s32.totalorder %s51, %s52
      %p61 = scmp.eq.s32.totalorder %s20, 0
      %p62 = por %p60, %p61
      %p63 = scmp.ne.s32.totalorder %s51, %s52
      %p64 = scmp.eq.s32.totalorder %s21, 1
      %p65 = por %p63, %p64
      %p67 = scmp.ne.s32.totalorder %s52, %s66
      %p68 = scmp.eq.s32.totalorder %s21, 0
      %p69 = por %p67, %p68
      %s71 = sadd.s32 %s70, 1
      %p74 = scmp.eq.s32.totalorder %s15, 1
      %p75 = scmp.ne.s32.totalorder %s70, %s72
      %p76 = scmp.eq.s32.totalorder %s15, 0
      %p77 = por %p75, %p76
      %p78 = scmp.ne.s32.totalorder %s70, %s72
      %p79 = scmp.eq.s32.totalorder %s20, 1
      %p80 = por %p78, %p79
      %p81 = scmp.ne.s32.totalorder %s72, %s73
      %p82 = scmp.eq.s32.totalorder %s20, 0
      %p83 = por %p81, %p82
      %p84 = scmp.ne.s32.totalorder %s72, %s73
      %p85 = scmp.eq.s32.totalorder %s21, 1
      %p86 = por %p84, %p85
      %p88 = scmp.ne.s32.totalorder %s73, %s87
      %p89 = scmp.eq.s32.totalorder %s21, 0
      %p90 = por %p88, %p89
      %s92 = sadd.s32 %s91, 1
      %p95 = scmp.eq.s32.totalorder %s15, 1
      %p96 = scmp.ne.s32.totalorder %s91, %s93
      %p97 = scmp.eq.s32.totalorder %s15, 0
      %p98 = por %p96, %p97
      %p99 = scmp.ne.s32.totalorder %s91, %s93
      %p100 = scmp.eq.s32.totalorder %s20, 1
      %p101 = por %p99, %p100
      %p102 = scmp.ne.s32.totalorder %s93, %s94
      %p103 = scmp.eq.s32.totalorder %s20, 0
      %p104 = por %p102, %p103
      %p105 = scmp.ne.s32.totalorder %s93, %s94
      %p106 = scmp.eq.s32.totalorder %s21, 1
      %p107 = por %p105, %p106
      %p109 = scmp.ne.s32.totalorder %s94, %s108
      %p110 = scmp.eq.s32.totalorder %s21, 0
      %p111 = por %p109, %p110
      %s113 = sadd.s32 %s112, 1
      %p116 = scmp.eq.s32.totalorder %s15, 1
      %p117 = scmp.ne.s32.totalorder %s112, %s114
      %p118 = scmp.eq.s32.totalorder %s15, 0
      %p119 = por %p117, %p118
      %p120 = scmp.ne.s32.totalorder %s112, %s114
      %p121 = scmp.eq.s32.totalorder %s20, 1
      %p122 = por %p120, %p121
      %p123 = scmp.ne.s32.totalorder %s114, %s115
      %p124 = scmp.eq.s32.totalorder %s20, 0
      %p125 = por %p123, %p124
      %p126 = scmp.ne.s32.totalorder %s114, %s115
      %p127 = scmp.eq.s32.totalorder %s21, 1
      %p128 = por %p126, %p127
      %p130 = scmp.ne.s32.totalorder %s115, %s129
      %p131 = scmp.eq.s32.totalorder %s21, 0
      %p132 = por %p130, %p131
      %s133 = ssub.s32 %s15, %s22
      %p134 = scmp.eq.s32.totalorder %s133, 0
      %s136 = sadd.s32 %s135, 1
      %s137 = scalar_select %p134, %s135, %s136
      %p140 = pneg %p134
      %p141 = scmp.eq.s32.totalorder %s15, 1
      %p142 = por %p140, %p141
      %p143 = scmp.ne.s32.totalorder %s135, %s138
      %p144 = scmp.eq.s32.totalorder %s15, 0
      %p145 = por %p143, %p144
      %p146 = scmp.ne.s32.totalorder %s135, %s138
      %p147 = scmp.eq.s32.totalorder %s20, 1
      %p148 = por %p146, %p147
      %p149 = scmp.ne.s32.totalorder %s138, %s139
      %p150 = scmp.eq.s32.totalorder %s20, 0
      %p151 = por %p149, %p150
      %p152 = scmp.ne.s32.totalorder %s138, %s139
      %p153 = scmp.eq.s32.totalorder %s21, 1
      %p154 = por %p152, %p153
      %p156 = scmp.ne.s32.totalorder %s139, %s155
      %p157 = scmp.eq.s32.totalorder %s21, 0
      %p158 = por %p156, %p157
      %p159 = scmp.le.s32.totalorder 1, %s15
      %p160 = scmp.lt.s32.totalorder %s15, 3
      %p161 = pnand %p159, %p160
      %p162 = pneg %p161
      // Predicated region
      $region9: #{tpu_custom_call.1} parent=5 // pred_check
        _
      $region10: #{tpu_custom_call.1} parent=5 // pred_check_branch
        %164 = sbr.rel (%p161) target = $region12
      $region11: #{tpu_custom_call.1} parent=5 // pred_region
        %s165 = ssub.s32 %s15, 1
        // Predicated region
        $region13: #{tpu_custom_call.1} parent=11 // pred_check
          %p166 = pneg %p62
        $region14: #{tpu_custom_call.1} parent=11 // pred_check_branch
          %168 = sbr.rel (%p166) target = $region16
        $region15: #{tpu_custom_call.1} parent=11 // pred_region
          _
        $region16: #{tpu_custom_call.1} parent=11 // pred_fallthru
          _
        // Predicated region
        $region17: #{tpu_custom_call.1} parent=11 // pred_check
          %p169 = pneg %p83
        $region18: #{tpu_custom_call.1} parent=11 // pred_check_branch
          %171 = sbr.rel (%p169) target = $region20
        $region19: #{tpu_custom_call.1} parent=11 // pred_region
          _
        $region20: #{tpu_custom_call.1} parent=11 // pred_fallthru
          _
        // Predicated region
        $region21: #{tpu_custom_call.1} parent=11 // pred_check
          %p172 = pneg %p104
        $region22: #{tpu_custom_call.1} parent=11 // pred_check_branch
          %174 = sbr.rel (%p172) target = $region24
        $region23: #{tpu_custom_call.1} parent=11 // pred_region
          _
        $region24: #{tpu_custom_call.1} parent=11 // pred_fallthru
          _
        // Predicated region
        $region25: #{tpu_custom_call.1} parent=11 // pred_check
          %p175 = pneg %p125
        $region26: #{tpu_custom_call.1} parent=11 // pred_check_branch
          %177 = sbr.rel (%p175) target = $region28
        $region27: #{tpu_custom_call.1} parent=11 // pred_region
          _
        $region28: #{tpu_custom_call.1} parent=11 // pred_fallthru
          _
      $region12: #{tpu_custom_call.1} parent=5 // pred_fallthru
        _
      %p178 = scmp.lt.s32.totalorder %s15, 2
      // Predicated region
      $region29: #{tpu_custom_call.1} parent=5 // pred_check
        %p179 = pneg %p178
      $region30: #{tpu_custom_call.1} parent=5 // pred_check_branch
        %181 = sbr.rel (%p179) target = $region32
      $region31: #{tpu_custom_call.1} parent=5 // pred_region
        // Predicated region
        $region33: #{tpu_custom_call.1} parent=31 // pred_check
          %p182 = pneg %p35
        $region34: #{tpu_custom_call.1} parent=31 // pred_check_branch
          %184 = sbr.rel (%p182) target = $region36
        $region35: #{tpu_custom_call.1} parent=31 // pred_region
          %s185 = sand.u32 %s25, 1
          %s186 = sand.u32 %s25, 1
          %s187 = smul.addr %s186, 16
          %s188 = scalar_lea.vmem [#allocation3], %s187
          %s189 = smul.addr %s15, 8
          %s190 = scalar_lea.vmem %s0, %s189
          // Predicated region
          $region37: #{tpu_custom_call.1} parent=35 // pred_check
            _
          $region38: #{tpu_custom_call.1} parent=35 // pred_check_branch
            %192 = sbr.rel (0) target = $region40
          $region39: #{tpu_custom_call.1} parent=35 // pred_region
            // Predicated region
            $region41: #{tpu_custom_call.1} parent=39 // pred_check
              _
            $region42: #{tpu_custom_call.1} parent=39 // pred_check_branch
              %194 = sbr.rel (0) target = $region44
            $region43: #{tpu_custom_call.1} parent=39 // pred_region
              // Predicated region
              $region56: #{tpu_custom_call.1} parent=43 // pred_check
                _
              $region57: #{tpu_custom_call.1} parent=43 // pred_check_branch
                %211 = sbr.rel (0) target = $region59
              $region58: #{tpu_custom_call.1} parent=43 // pred_region
                loop: start=0, step=1, limit=1
                $region60: #{tpu_custom_call.1} parent=58 // loop_pre_header
                  _
                $region61: #{tpu_custom_call.1} parent=58 // loop_header
                  %s213 = sphi 0, %s217
                  %p214 = scmp.ge.s32.totalorder %s213, 1
                  %s218 = sphi %s190, %s190
                  %s219 = sphi %s188, %s188
                $region62: #{tpu_custom_call.1} parent=58 // loop_header_branch
                  %216 = sbr.rel (%p214) target = $region66
                $region63: #{tpu_custom_call.1} parent=58 // loop_body
                  %v220 = vld [vmem:[%s218] sm:$0xff]
                  %221 = vst [vmem:[%s219] sm:$0xff] %v220
                  %v222 = vld [vmem:[%s218 + $0x10] sm:$0xff]
                  %223 = vst [vmem:[%s219 + $0x8] sm:$0xff] %v222
                $region64: #{tpu_custom_call.1} parent=58 // loop_footer
                  %s217 = sadd.s32 1, %s213
                $region65: #{tpu_custom_call.1} parent=58 // loop_footer_branch
                  %212 = sbr.rel target = $region61
                $region66: #{tpu_custom_call.1} parent=58 // loop_exit
                  _
              $region59: #{tpu_custom_call.1} parent=43 // pred_fallthru
                _
              // Predicated region
              $region67: #{tpu_custom_call.1} parent=43 // pred_check
                _
              $region68: #{tpu_custom_call.1} parent=43 // pred_check_branch
                %225 = sbr.rel target = $region70
              $region69: #{tpu_custom_call.1} parent=43 // pred_region
                _
              $region70: #{tpu_custom_call.1} parent=43 // pred_fallthru
                _
            $region44: #{tpu_custom_call.1} parent=39 // pred_fallthru
              _
            // Predicated region
            $region45: #{tpu_custom_call.1} parent=39 // pred_check
              _
            $region46: #{tpu_custom_call.1} parent=39 // pred_check_branch
              %196 = sbr.rel target = $region48
            $region47: #{tpu_custom_call.1} parent=39 // pred_region
              loop: start=0, step=1, limit=1
              $region49: #{tpu_custom_call.1} parent=47 // loop_pre_header
                _
              $region50: #{tpu_custom_call.1} parent=47 // loop_header
                %s199 = sphi 0, %s203
                %p200 = scmp.ge.s32.totalorder %s199, 1
                %s204 = sphi %s190, %s190
                %s205 = sphi %s188, %s188
              $region51: #{tpu_custom_call.1} parent=47 // loop_header_branch
                %202 = sbr.rel (%p200) target = $region55
              $region52: #{tpu_custom_call.1} parent=47 // loop_body
                %v206 = vld [vmem:[%s204] sm:$0xff]
                %207 = vst [vmem:[%s205] sm:$0xff] %v206
                %v208 = vld [vmem:[%s204 + $0x10] sm:$0xff]
                %209 = vst [vmem:[%s205 + $0x8] sm:$0xff] %v208
              $region53: #{tpu_custom_call.1} parent=47 // loop_footer
                %s203 = sadd.s32 1, %s199
              $region54: #{tpu_custom_call.1} parent=47 // loop_footer_branch
                %198 = sbr.rel target = $region50
              $region55: #{tpu_custom_call.1} parent=47 // loop_exit
                _
            $region48: #{tpu_custom_call.1} parent=39 // pred_fallthru
              _
          $region40: #{tpu_custom_call.1} parent=35 // pred_fallthru
            _
          %226 = vnop
        $region36: #{tpu_custom_call.1} parent=31 // pred_fallthru
          _
      $region32: #{tpu_custom_call.1} parent=5 // pred_fallthru
        _
      %p227 = scmp.le.s32.totalorder 1, %s15
      %p228 = scmp.lt.s32.totalorder %s15, 3
      %p229 = pnand %p227, %p228
      %p230 = pneg %p229
      // Predicated region
      $region71: #{tpu_custom_call.1} parent=5 // pred_check
        _
      $region72: #{tpu_custom_call.1} parent=5 // pred_check_branch
        %232 = sbr.rel (%p229) target = $region74
      $region73: #{tpu_custom_call.1} parent=5 // pred_region
        %s233 = ssub.s32 %s15, 1
        %s234 = sand.u32 %s28, 1
        %s235 = sand.u32 %s28, 1
        %s236 = smul.addr %s235, 16
        %s237 = scalar_lea.vmem [#allocation3], %s236
        // Predicated region
        $region75: #{tpu_custom_call.1} parent=73 // pred_check
          %p238 = pneg %p41
        $region76: #{tpu_custom_call.1} parent=73 // pred_check_branch
          %240 = sbr.rel (%p238) target = $region78
        $region77: #{tpu_custom_call.1} parent=73 // pred_region
          _
        $region78: #{tpu_custom_call.1} parent=73 // pred_fallthru
          _
        %s241 = sand.u32 %s28, 1
        %s242 = sand.u32 %s28, 1
        %s243 = smul.addr %s242, 16
        %s244 = scalar_lea.vmem [#allocation3], %s243
        %p245 = pneg %p41
        %p246 = pneg %p38
        %p247 = pneg %p62
        %p248 = pneg %p59
        %p249 = pneg %p83
        %p250 = pneg %p80
        %p251 = pneg %p104
        %p252 = pneg %p101
        %p253 = pneg %p125
        %p254 = pneg %p122
        %p255 = pneg %p151
        %p256 = pneg %p148
        %s257 = sand.u32 %s138, 1
        %s258 = scalar_lea.sflag [#allocation5], %s257
        %s259 = sand.u32 %s138, 1
        %s260 = scalar_lea.vmem [#allocation4], %s259
        %v261 = vld [vmem:[%s1] sm:$0xff]
        %v262 = vld [vmem:[%s1 + $0x8] sm:$0xff]
        %v263 = vld [vmem:[%s1 + $0x10] sm:$0xff]
        %v264 = vld [vmem:[%s1 + $0x18] sm:$0xff]
        %v265 = vld [vmem:[%s237] sm:$0xff]
        %v266 = vld [vmem:[%s237 + $0x8] sm:$0x3f]
        %v267 = vld [vmem:[%s2] sm:$0xff]
        %v268 = vld [vmem:[%s2 + $0x8] sm:$0xff]
        %v269 = vld [vmem:[%s2 + $0x10] sm:$0xff]
        %v270 = vld [vmem:[%s2 + $0x18] sm:$0xff]
        %272 = vset.pattern.permute.xlu0 0
        %273 = vperm.xlu0 %272, %v267
        %v274 = vpop.permute.xlu0 %273
        %277 = vset.pattern.permute.xlu0 0
        %278 = vperm.xlu0 %277, %v268
        %v279 = vpop.permute.xlu0 %278
        %282 = vset.pattern.permute.xlu0 0
        %283 = vperm.xlu0 %282, %v269
        %v284 = vpop.permute.xlu0 %283
        %287 = vset.pattern.permute.xlu0 0
        %288 = vperm.xlu0 %287, %v270
        %v289 = vpop.permute.xlu0 %288
        %vm291 = vcmask 113664
        %v293 = vsel %vm291, %v261, 0
        %v296 = vsel %vm291, %v262, 0
        %v299 = vsel %vm291, %v263, 0
        %v302 = vsel %vm291, %v264, 0
        %vm304 = vcmask 1045504
        %v306 = vsel %vm304, %v266, 0
        %308 = vmatprep.subr.mxu0 0.0
        %309 = vmatpush1.msra.mxu0 %v265
        %310 = vmatprep.subr.mxu0 0.0
        %311 = vmatpush1.msra.mxu0 %v306
        %312 = vmatprep.subr.mxu0 0.0
        %313 = vmatpush1.msra.mxu0 0.0
        %314 = vmatprep.subr.mxu0 0.0
        %315 = vmatpush1.msra.mxu0 0.0
        %316 = vmatprep.subr.mxu0 0.0
        %317 = vmatpush1.msra.mxu0 0.0
        %318 = vmatprep.subr.mxu0 0.0
        %319 = vmatpush1.msra.mxu0 0.0
        %320 = vmatprep.subr.mxu0 0.0
        %321 = vmatpush1.msra.mxu0 0.0
        %322 = vmatprep.subr.mxu0 0.0
        %323 = vmatpush1.msra.mxu0 0.0
        %324 = vmatprep.subr.mxu0 0.0
        %325 = vmatpush1.msra.mxu0 0.0
        %326 = vmatprep.subr.mxu0 0.0
        %327 = vmatpush1.msra.mxu0 0.0
        %328 = vmatprep.subr.mxu0 0.0
        %329 = vmatpush1.msra.mxu0 0.0
        %330 = vmatprep.subr.mxu0 0.0
        %331 = vmatpush1.msra.mxu0 0.0
        %332 = vmatprep.subr.mxu0 0.0
        %333 = vmatpush1.msra.mxu0 0.0
        %334 = vmatprep.subr.mxu0 0.0
        %335 = vmatpush1.msra.mxu0 0.0
        %336 = vmatprep.subr.mxu0 0.0
        %337 = vmatpush1.msra.mxu0 0.0
        %338 = vmatprep.subr.mxu0 0.0
        %339 = vmatpush1.msra.mxu0 0.0
        %340 = vmatprep.subr.mxu0 0.0
        %341 = vmatpush1.msra.mxu0 0.0
        %342 = vmatprep.subr.mxu0 0.0
        %343 = vmatpush1.msra.mxu0 0.0
        %344 = vmatprep.subr.mxu0 0.0
        %345 = vmatpush1.msra.mxu0 0.0
        %346 = vmatprep.subr.mxu0 0.0
        %347 = vmatpush1.msra.mxu0 0.0
        %348 = vmatprep.subr.mxu0 0.0
        %349 = vmatpush1.msra.mxu0 0.0
        %350 = vmatprep.subr.mxu0 0.0
        %351 = vmatpush1.msra.mxu0 0.0
        %352 = vmatprep.subr.mxu0 0.0
        %353 = vmatpush1.msra.mxu0 0.0
        %354 = vmatprep.subr.mxu0 0.0
        %355 = vmatpush1.msra.mxu0 0.0
        %356 = vmatprep.subr.mxu0 0.0
        %357 = vmatpush1.msra.mxu0 0.0
        %358 = vmatprep.subr.mxu0 0.0
        %359 = vmatpush1.msra.mxu0 0.0
        %360 = vmatprep.subr.mxu0 0.0
        %361 = vmatpush1.msra.mxu0 0.0
        %362 = vmatprep.subr.mxu0 0.0
        %363 = vmatpush1.msra.mxu0 0.0
        %364 = vmatprep.subr.mxu0 0.0
        %365 = vmatpush1.msra.mxu0 0.0
        %366 = vmatprep.subr.mxu0 0.0
        %367 = vmatpush1.msra.mxu0 0.0
        %368 = vmatprep.subr.mxu0 0.0
        %369 = vmatpush1.msra.mxu0 0.0
        %370 = vmatprep.subr.mxu0 0.0
        %371 = vmatpush1.msra.mxu0 0.0
        %372 = vmatprep.mubr.f32.mxu0 0.0
        %373 = vmatmul.mubr.f32.gmra.mrb[0].mxu0 %v293
        %v374 = vpop.f32.mrb[0].mxu0
        %v375 = vadd.f32 %v274, %v374
        %v376 = vpop.f32.mrb[0].mxu0
        %377 = vmatprep.mubr.f32.mxu0 0.0
        %378 = vmatmul.mubr.f32.gmra.mrb[0].mxu0 %v296
        %v379 = vpop.f32.mrb[0].mxu0
        %v380 = vadd.f32 %v279, %v379
        %v381 = vpop.f32.mrb[0].mxu0
        %382 = vmatprep.mubr.f32.mxu0 0.0
        %383 = vmatmul.mubr.f32.gmra.mrb[0].mxu0 %v299
        %v384 = vpop.f32.mrb[0].mxu0
        %v385 = vadd.f32 %v284, %v384
        %v386 = vpop.f32.mrb[0].mxu0
        %387 = vmatprep.mubr.f32.mxu0 0.0
        %388 = vmatmul.mubr.f32.gmra.mrb[0].mxu0 %v302
        %v389 = vpop.f32.mrb[0].mxu0
        %v390 = vadd.f32 %v289, %v389
        %v391 = vpop.f32.mrb[0].mxu0
        %392 = vdwg.mxu0
        %v393 = vmax.f32 %v375, 0.0
        %v394 = vmax.f32 %v380, 0.0
        %v395 = vmax.f32 %v385, 0.0
        %v396 = vmax.f32 %v390, 0.0
        %v397 = vld [vmem:[%s3] sm:$0x1]
        %s398 = sld [smem:[#allocation2]]
        %v399 = vstv %s398
        %vm400 = vcmask 261120
        %v402 = vsel %vm400, %v397, 0
        %404 = vmatprep.subr.mxu0 0.0
        %405 = vmatpush1.msra.mxu0 %v393
        %406 = vmatprep.subr.mxu0 0.0
        %407 = vmatpush1.msra.mxu0 %v394
        %408 = vmatprep.subr.mxu0 0.0
        %409 = vmatpush1.msra.mxu0 %v395
        %410 = vmatprep.subr.mxu0 0.0
        %411 = vmatpush1.msra.mxu0 %v396
        %412 = vmatprep.subr.mxu0 0.0
        %413 = vmatpush1.msra.mxu0 0.0
        %414 = vmatprep.subr.mxu0 0.0
        %415 = vmatpush1.msra.mxu0 0.0
        %416 = vmatprep.subr.mxu0 0.0
        %417 = vmatpush1.msra.mxu0 0.0
        %418 = vmatprep.subr.mxu0 0.0
        %419 = vmatpush1.msra.mxu0 0.0
        %420 = vmatprep.subr.mxu0 0.0
        %421 = vmatpush1.msra.mxu0 0.0
        %422 = vmatprep.subr.mxu0 0.0
        %423 = vmatpush1.msra.mxu0 0.0
        %424 = vmatprep.subr.mxu0 0.0
        %425 = vmatpush1.msra.mxu0 0.0
        %426 = vmatprep.subr.mxu0 0.0
        %427 = vmatpush1.msra.mxu0 0.0
        %428 = vmatprep.subr.mxu0 0.0
        %429 = vmatpush1.msra.mxu0 0.0
        %430 = vmatprep.subr.mxu0 0.0
        %431 = vmatpush1.msra.mxu0 0.0
        %432 = vmatprep.subr.mxu0 0.0
        %433 = vmatpush1.msra.mxu0 0.0
        %434 = vmatprep.subr.mxu0 0.0
        %435 = vmatpush1.msra.mxu0 0.0
        %436 = vmatprep.subr.mxu0 0.0
        %437 = vmatpush1.msra.mxu0 0.0
        %438 = vmatprep.subr.mxu0 0.0
        %439 = vmatpush1.msra.mxu0 0.0
        %440 = vmatprep.subr.mxu0 0.0
        %441 = vmatpush1.msra.mxu0 0.0
        %442 = vmatprep.subr.mxu0 0.0
        %443 = vmatpush1.msra.mxu0 0.0
        %444 = vmatprep.subr.mxu0 0.0
        %445 = vmatpush1.msra.mxu0 0.0
        %446 = vmatprep.subr.mxu0 0.0
        %447 = vmatpush1.msra.mxu0 0.0
        %448 = vmatprep.subr.mxu0 0.0
        %449 = vmatpush1.msra.mxu0 0.0
        %450 = vmatprep.subr.mxu0 0.0
        %451 = vmatpush1.msra.mxu0 0.0
        %452 = vmatprep.subr.mxu0 0.0
        %453 = vmatpush1.msra.mxu0 0.0
        %454 = vmatprep.subr.mxu0 0.0
        %455 = vmatpush1.msra.mxu0 0.0
        %456 = vmatprep.subr.mxu0 0.0
        %457 = vmatpush1.msra.mxu0 0.0
        %458 = vmatprep.subr.mxu0 0.0
        %459 = vmatpush1.msra.mxu0 0.0
        %460 = vmatprep.subr.mxu0 0.0
        %461 = vmatpush1.msra.mxu0 0.0
        %462 = vmatprep.subr.mxu0 0.0
        %463 = vmatpush1.msra.mxu0 0.0
        %464 = vmatprep.subr.mxu0 0.0
        %465 = vmatpush1.msra.mxu0 0.0
        %466 = vmatprep.subr.mxu0 0.0
        %467 = vmatpush1.msra.mxu0 0.0
        %468 = vmatprep.mubr.f32.mxu0 0.0
        %469 = vmatmul.mubr.f32.gmra.mrb[0].mxu0 %v402
        %v470 = vpop.f32.mrb[0].mxu0
        %v471 = vadd.f32 %v399, %v470
        %v472 = vpop.f32.mrb[0].mxu0
        %473 = vdwg.mxu0
        %474 = vst [vmem:[%s260] sm:$0x1] %v471
        %s475 = sand.u32 %s138, 1
        %s476 = scalar_lea.sflag [#allocation5], %s475
        %s477 = sand.u32 %s138, 1
        %s478 = scalar_lea.vmem [#allocation4], %s477
        // Predicated region
        $region79: #{tpu_custom_call.1} parent=73 // pred_check
          %p479 = pneg %p148
        $region80: #{tpu_custom_call.1} parent=73 // pred_check_branch
          %481 = sbr.rel (%p479) target = $region82
        $region81: #{tpu_custom_call.1} parent=73 // pred_region
          %s483 = ssub.s32 16, 16
          %484 = vsyncadd %s476, %s483
          %s485 = smul.addr %s20, 16
          %s486 = scalar_lea.hbm %s5, %s485
          %s488 = sshll.u32 %s478, 4
          %s489 = int_to_ptr.vmem [resolvable:$true] %s488
          %491 = dma.vmem_to_hbm [thread:$0]  %s489, 16, %s486, %s476
        $region82: #{tpu_custom_call.1} parent=73 // pred_fallthru
          _
      $region74: #{tpu_custom_call.1} parent=5 // pred_fallthru
        _
      %p492 = scmp.le.s32.totalorder 2, %s15
      // Predicated region
      $region83: #{tpu_custom_call.1} parent=5 // pred_check
        %p493 = pneg %p492
      $region84: #{tpu_custom_call.1} parent=5 // pred_check_branch
        %495 = sbr.rel (%p493) target = $region86
      $region85: #{tpu_custom_call.1} parent=5 // pred_region
        %s496 = ssub.s32 %s15, 2
        // Predicated region
        $region87: #{tpu_custom_call.1} parent=85 // pred_check
          %p497 = pneg %p154
        $region88: #{tpu_custom_call.1} parent=85 // pred_check_branch
          %499 = sbr.rel (%p497) target = $region90
        $region89: #{tpu_custom_call.1} parent=85 // pred_region
          %s500 = sand.u32 %s139, 1
          %s501 = scalar_lea.sflag [#allocation5], %s500
          %s502 = sand.u32 %s139, 1
          %s503 = scalar_lea.vmem [#allocation4], %s502
          %504 = dma.done %s501, 16
        $region90: #{tpu_custom_call.1} parent=85 // pred_fallthru
          _
      $region86: #{tpu_custom_call.1} parent=5 // pred_fallthru
        _
    $region6: #{tpu_custom_call.1} parent=1 // loop_footer
      %s19 = sadd.s32 1, %s15
    $region7: #{tpu_custom_call.1} parent=1 // loop_footer_branch
      %14 = sbr.rel target = $region3
    $region8: #{tpu_custom_call.1} parent=1 // loop_exit
      _
    %505 = vsyncpa [#allocation5], 1
    %s506 = scalar_lea.sflag [#allocation5], 1
    %507 = vsyncpa %s506, 1

</llo_original>
